<compile_context>
chip_gen: v7x
topology: tpu7x:2x2x1
jax: 0.10.0
libtpu: 0.0.40
codegen_flags: <defaults>
</compile_context>

<pallas_src>
import jax
import jax.numpy as jnp
from jax import lax
from jax.experimental import pallas as pl
from jax.experimental.pallas import tpu as pltpu

C_IN = 24
CONV_DIM = 32
BN_EPS = 1e-5
PAD = 3          # wrapper-side zero padding per side (one per conv layer)


def _stage1_kernel(x_ref, w1a_ref, w1b_ref, w2a_ref, w2b_ref,
                   h2_ref, sum_ref, ssq_ref):
    """conv1 -> ReLU -> conv2, plus per-sample BN partial sums.

    x_ref  : (1, L+6, 24)  zero-extended input, positions [-3, L+2]
    h2_ref : (1, L+4, 64)  zero-extended conv2 output, positions [-1, L+2]
    sum_ref, ssq_ref : (1, 1, 64) per-sample sum / sum-of-squares of conv2
                       (the two boundary rows of h2 are exactly zero, so they
                        do not bias the statistics).
    """
    lext = x_ref.shape[1]          # L + 6
    n1 = lext - 1                  # L + 5 conv1 output rows
    n2 = lext - 2                  # L + 4 conv2 output rows
    ci = x_ref.shape[2]

    # ---- conv1: two taps = two MXU matmuls on ref-sliced (shifted) inputs ----
    xl = x_ref[:, 0:n1, :].reshape(n1, ci)        # x[t-1]
    xr = x_ref[:, 1:lext, :].reshape(n1, ci)      # x[t]
    h1 = jnp.dot(xl, w1a_ref[...], preferred_element_type=jnp.float32)
    h1 = h1 + jnp.dot(xr, w1b_ref[...], preferred_element_type=jnp.float32)
    h1 = jnp.maximum(h1, 0.0)                     # (L+5, 32), positions [-2, L+2]

    # ---- conv2 (value slices give the shifted taps, single store below) ----
    h2 = jnp.dot(h1[0:n2, :], w2a_ref[...], preferred_element_type=jnp.float32)
    h2 = h2 + jnp.dot(h1[1:n1, :], w2b_ref[...], preferred_element_type=jnp.float32)
    # (L+4, 64), positions [-1, L+2]; rows 0 and L+3 are exactly zero.

    c2 = h2.shape[1]
    h2_ref[...] = h2.reshape(1, n2, c2)

    # ---- single-pass BN partial statistics ----
    sum_ref[...] = jnp.sum(h2, axis=0, keepdims=True).reshape(1, 1, c2)
    ssq_ref[...] = jnp.sum(h2 * h2, axis=0, keepdims=True).reshape(1, 1, c2)


def _stage2_kernel(h2_ref, scale_ref, shift_ref, w3a_ref, w3b_ref, out_ref):
    """BN apply -> ReLU -> conv3 with a lane-dense (1, 1, L+3) output.

    h2_ref      : (1, L+4, 64) zero-extended conv2 output, positions [-1, L+2]
    scale/shift : (1, 64) folded BatchNorm scale / shift
    w3a/w3b     : (1, 64) conv3 taps (row vectors)
    out_ref     : (1, 1, L+3)  -- L+3 on the lane axis (already NCL layout)
    """
    n2, c2 = h2_ref.shape[1], h2_ref.shape[2]     # L + 4, 64
    n3 = n2 - 1                                   # L + 3 output positions

    h = h2_ref[...] * scale_ref[...] + shift_ref[...]
    h = jnp.maximum(h, 0.0)
    # Re-zero the two boundary rows (positions -1 and L+2): BN's shift makes
    # them nonzero, but conv3 must see true zero padding there.
    row = lax.broadcasted_iota(jnp.int32, (1, n2, c2), 1)
    h = jnp.where((row >= 1) & (row <= n2 - 2), h, 0.0)

    # conv3 (64 -> 1): VPU multiply + lane reduction (XLU); keeps the length
    # dimension on lanes so the output store is full-width, not 1-lane masked.
    ua = h[:, 0:n3, :]                            # h2n[t-1]
    ub = h[:, 1:n2, :]                            # h2n[t]
    y = jnp.sum(ua * w3a_ref[...] + ub * w3b_ref[...], axis=-1)   # (1, L+3)
    out_ref[...] = y[:, None, :]


def discriminator_forward(x_ncl, params):
    """x_ncl: (N, 24, L) float32 (PyTorch NCL layout).  Returns (N, 1, L+3)."""
    w1, w2, gamma, beta, w3 = params              # conv weights: (Cout, Cin, 2)
    N, ci, L = x_ncl.shape
    assert ci == C_IN
    c1, c2 = CONV_DIM, CONV_DIM * 2
    L2, L3 = L + 2, L + 3
    n_ext = L + 2 * PAD                           # L + 6
    n2 = L + 4
    f32 = jnp.float32

    # Layout glue (plain JAX, fused by XLA): NCL -> NLC, zero-extend L.
    x_nlc = jnp.transpose(x_ncl, (0, 2, 1)).astype(f32)
    x_ext = jnp.pad(x_nlc, ((0, 0), (PAD, PAD), (0, 0)))

    tap = lambda w, k: jnp.transpose(w[:, :, k]).astype(f32)     # (Cin, Cout)
    w1a, w1b = tap(w1, 0), tap(w1, 1)
    w2a, w2b = tap(w2, 0), tap(w2, 1)
    w3a = w3[:, :, 0].astype(f32)                 # (1, 64) row vectors
    w3b = w3[:, :, 1].astype(f32)

    par = pltpu.CompilerParams(dimension_semantics=("parallel",))

    # ---- stage 1: conv1 + ReLU + conv2 + per-sample BN partial sums ----
    h2, bn_sum, bn_ssq = pl.pallas_call(
        _stage1_kernel,
        grid=(N,),
        in_specs=[
            pl.BlockSpec((1, n_ext, C_IN), lambda i: (i, 0, 0)),
            pl.BlockSpec((C_IN, c1), lambda i: (0, 0)),
            pl.BlockSpec((C_IN, c1), lambda i: (0, 0)),
            pl.BlockSpec((c1, c2), lambda i: (0, 0)),
            pl.BlockSpec((c1, c2), lambda i: (0, 0)),
        ],
        out_specs=(
            pl.BlockSpec((1, n2, c2), lambda i: (i, 0, 0)),
            pl.BlockSpec((1, 1, c2), lambda i: (i, 0, 0)),
            pl.BlockSpec((1, 1, c2), lambda i: (i, 0, 0)),
        ),
        out_shape=(
            jax.ShapeDtypeStruct((N, n2, c2), f32),
            jax.ShapeDtypeStruct((N, 1, c2), f32),
            jax.ShapeDtypeStruct((N, 1, c2), f32),
        ),
        compiler_params=par,
    )(x_ext, w1a, w1b, w2a, w2b)

    # ---- tiny BN stat combine (64 channels) in plain JAX ----
    count = N * L2                                # true token count (pads are 0)
    mean = jnp.sum(bn_sum, axis=(0, 1)) / count
    ex2 = jnp.sum(bn_ssq, axis=(0, 1)) / count
    var = jnp.maximum(ex2 - mean * mean, 0.0)     # biased variance (train mode)
    scale = gamma.astype(f32) * lax.rsqrt(var + BN_EPS)
    shift = beta.astype(f32) - mean * scale
    scale2d = scale.reshape(1, c2)
    shift2d = shift.reshape(1, c2)

    # ---- stage 2: BN apply + ReLU + conv3 (lane-dense NCL output) ----
    out = pl.pallas_call(
        _stage2_kernel,
        grid=(N,),
        in_specs=[
            pl.BlockSpec((1, n2, c2), lambda i: (i, 0, 0)),
            pl.BlockSpec((1, c2), lambda i: (0, 0)),
            pl.BlockSpec((1, c2), lambda i: (0, 0)),
            pl.BlockSpec((1, c2), lambda i: (0, 0)),
            pl.BlockSpec((1, c2), lambda i: (0, 0)),
        ],
        out_specs=pl.BlockSpec((1, 1, L3), lambda i: (i, 0, 0)),
        out_shape=jax.ShapeDtypeStruct((N, 1, L3), f32),
        compiler_params=par,
    )(h2, scale2d, shift2d, w3a, w3b)

    return out                                    # already NCL: (N, 1, L+3)


def reference_forward(x, params):
    """Pure-JAX reference (NCL layout) mirroring the PyTorch forward."""
    w1, w2, gamma, beta, w3 = params
    dn = ("NCH", "OIH", "NCH")
    conv1d = lambda h, w: lax.conv_general_dilated(
        h, w, window_strides=(1,), padding=[(1, 1)], dimension_numbers=dn)
    h = jax.nn.relu(conv1d(x, w1))
    h = conv1d(h, w2)
    mean = jnp.mean(h, axis=(0, 2), keepdims=True)
    var = jnp.mean((h - mean) ** 2, axis=(0, 2), keepdims=True)
    h = (h - mean) / jnp.sqrt(var + BN_EPS)
    h = h * gamma.reshape(1, -1, 1) + beta.reshape(1, -1, 1)
    h = jax.nn.relu(h)
    return conv1d(h, w3)


if __name__ == "__main__":
    key = jax.random.PRNGKey(0)
    kx, k1, k2, k3, kg, kb = jax.random.split(key, 6)

    N, L = 2, 16
    x = jax.random.normal(kx, (N, C_IN, L), jnp.float32)

    # Deterministic synthetic parameters (shapes from the module's __init__).
    w1 = 0.1 * jax.random.normal(k1, (CONV_DIM, C_IN, 2), jnp.float32)
    w2 = 0.1 * jax.random.normal(k2, (CONV_DIM * 2, CONV_DIM, 2), jnp.float32)
    w3 = 0.1 * jax.random.normal(k3, (1, CONV_DIM * 2, 2), jnp.float32)
    gamma = 1.0 + 0.1 * jax.random.normal(kg, (CONV_DIM * 2,), jnp.float32)
    beta = 0.1 * jax.random.normal(kb, (CONV_DIM * 2,), jnp.float32)
    params = (w1, w2, gamma, beta, w3)

    out = jax.block_until_ready(discriminator_forward(x, params))
    ref = reference_forward(x, params)

    assert out.shape == (N, 1, L + 3), out.shape
    err = float(jnp.max(jnp.abs(out - ref)))
    assert err < 1e-4, err
    print("KERNEL_OK")
</pallas_src>

<mosaic_0001>
module attributes {stable_mosaic.version = 11 : i64} {
  func.func @_stage1_kernel(%arg0: i32, %arg1: memref<1x22x24xf32, #tpu.memory_space<vmem>>, %arg2: memref<24x32xf32, #tpu.memory_space<vmem>>, %arg3: memref<24x32xf32, #tpu.memory_space<vmem>>, %arg4: memref<32x64xf32, #tpu.memory_space<vmem>>, %arg5: memref<32x64xf32, #tpu.memory_space<vmem>>, %arg6: memref<1x20x64xf32, #tpu.memory_space<vmem>>, %arg7: memref<1x1x64xf32, #tpu.memory_space<vmem>>, %arg8: memref<1x1x64xf32, #tpu.memory_space<vmem>>) attributes {dimension_semantics = [#tpu.dimension_semantics<parallel>], iteration_bounds = array<i64: 2>, scalar_prefetch = 0 : i64, scratch_operands = 0 : i64, tpu.core_type = #tpu.core_type<tc>, window_params = [{transform_indices = @transform_0, window_bounds = array<i64: 1, 22, 24>}, {pipeline_mode = #tpu.pipeline_mode<synchronous>, transform_indices = @transform_1, window_bounds = array<i64: 24, 32>}, {pipeline_mode = #tpu.pipeline_mode<synchronous>, transform_indices = @transform_2, window_bounds = array<i64: 24, 32>}, {pipeline_mode = #tpu.pipeline_mode<synchronous>, transform_indices = @transform_3, window_bounds = array<i64: 32, 64>}, {pipeline_mode = #tpu.pipeline_mode<synchronous>, transform_indices = @transform_4, window_bounds = array<i64: 32, 64>}, {transform_indices = @transform_5, window_bounds = array<i64: 1, 20, 64>}, {transform_indices = @transform_6, window_bounds = array<i64: 1, 1, 64>}, {transform_indices = @transform_7, window_bounds = array<i64: 1, 1, 64>}]} {
    %c0 = arith.constant 0 : index
    %c0_0 = arith.constant 0 : index
    %c0_1 = arith.constant 0 : index
    %0 = vector.load %arg1[%c0, %c0_0, %c0_1] : memref<1x22x24xf32, #tpu.memory_space<vmem>>, vector<1x21x24xf32>
    %1 = vector.shape_cast %0 : vector<1x21x24xf32> to vector<21x24xf32>
    %c0_2 = arith.constant 0 : index
    %c1 = arith.constant 1 : index
    %c0_3 = arith.constant 0 : index
    %2 = vector.load %arg1[%c0_2, %c1, %c0_3] : memref<1x22x24xf32, #tpu.memory_space<vmem>>, vector<1x21x24xf32>
    %3 = vector.shape_cast %2 : vector<1x21x24xf32> to vector<21x24xf32>
    %c0_4 = arith.constant 0 : index
    %c0_5 = arith.constant 0 : index
    %4 = vector.load %arg2[%c0_4, %c0_5] : memref<24x32xf32, #tpu.memory_space<vmem>>, vector<24x32xf32>
    %cst = arith.constant dense<0.000000e+00> : vector<21x32xf32>
    %5 = tpu.matmul %1, %4, %cst {dimension_numbers = #tpu.dot_dimension_numbers<[1], [0], [0], [1], [0, 0, 1, 1], [], []>} : vector<21x24xf32>, vector<24x32xf32>, vector<21x32xf32> -> vector<21x32xf32>
    %c0_6 = arith.constant 0 : index
    %c0_7 = arith.constant 0 : index
    %6 = vector.load %arg3[%c0_6, %c0_7] : memref<24x32xf32, #tpu.memory_space<vmem>>, vector<24x32xf32>
    %cst_8 = arith.constant dense<0.000000e+00> : vector<21x32xf32>
    %7 = tpu.matmul %3, %6, %cst_8 {dimension_numbers = #tpu.dot_dimension_numbers<[1], [0], [0], [1], [0, 0, 1, 1], [], []>} : vector<21x24xf32>, vector<24x32xf32>, vector<21x32xf32> -> vector<21x32xf32>
    %8 = arith.addf %5, %7 : vector<21x32xf32>
    %cst_9 = arith.constant 0.000000e+00 : f32
    %9 = vector.broadcast %cst_9 : f32 to vector<21x32xf32>
    %10 = arith.maximumf %8, %9 : vector<21x32xf32>
    %11 = vector.extract_strided_slice %10 {offsets = [0, 0], sizes = [20, 32], strides = [1, 1]} : vector<21x32xf32> to vector<20x32xf32>
    %c0_10 = arith.constant 0 : index
    %c0_11 = arith.constant 0 : index
    %12 = vector.load %arg4[%c0_10, %c0_11] : memref<32x64xf32, #tpu.memory_space<vmem>>, vector<32x64xf32>
    %cst_12 = arith.constant dense<0.000000e+00> : vector<20x64xf32>
    %13 = tpu.matmul %11, %12, %cst_12 {dimension_numbers = #tpu.dot_dimension_numbers<[1], [0], [0], [1], [0, 0, 1, 1], [], []>} : vector<20x32xf32>, vector<32x64xf32>, vector<20x64xf32> -> vector<20x64xf32>
    %14 = vector.extract_strided_slice %10 {offsets = [1, 0], sizes = [20, 32], strides = [1, 1]} : vector<21x32xf32> to vector<20x32xf32>
    %c0_13 = arith.constant 0 : index
    %c0_14 = arith.constant 0 : index
    %15 = vector.load %arg5[%c0_13, %c0_14] : memref<32x64xf32, #tpu.memory_space<vmem>>, vector<32x64xf32>
    %cst_15 = arith.constant dense<0.000000e+00> : vector<20x64xf32>
    %16 = tpu.matmul %14, %15, %cst_15 {dimension_numbers = #tpu.dot_dimension_numbers<[1], [0], [0], [1], [0, 0, 1, 1], [], []>} : vector<20x32xf32>, vector<32x64xf32>, vector<20x64xf32> -> vector<20x64xf32>
    %17 = arith.addf %13, %16 : vector<20x64xf32>
    %18 = vector.shape_cast %17 : vector<20x64xf32> to vector<1x20x64xf32>
    %c0_16 = arith.constant 0 : index
    %c0_17 = arith.constant 0 : index
    %c0_18 = arith.constant 0 : index
    %19 = vector.load %arg6[%c0_16, %c0_17, %c0_18] : memref<1x20x64xf32, #tpu.memory_space<vmem>>, vector<1x20x64xf32>
    tpu.vector_store %arg6[%c0_16, %c0_17, %c0_18], %18 {strides = array<i32>} : memref<1x20x64xf32, #tpu.memory_space<vmem>>, vector<1x20x64xf32>,
    %cst_19 = arith.constant dense<0.000000e+00> : vector<64xf32>
    %20 = vector.multi_reduction <add>, %17, %cst_19 [0] : vector<20x64xf32> to vector<64xf32>
    %21 = vector.shape_cast %20 : vector<64xf32> to vector<1x64xf32>
    %22 = vector.shape_cast %21 : vector<1x64xf32> to vector<1x1x64xf32>
    %c0_20 = arith.constant 0 : index
    %c0_21 = arith.constant 0 : index
    %c0_22 = arith.constant 0 : index
    %23 = vector.load %arg7[%c0_20, %c0_21, %c0_22] : memref<1x1x64xf32, #tpu.memory_space<vmem>>, vector<1x1x64xf32>
    tpu.vector_store %arg7[%c0_20, %c0_21, %c0_22], %22 {strides = array<i32>} : memref<1x1x64xf32, #tpu.memory_space<vmem>>, vector<1x1x64xf32>,
    %24 = arith.mulf %17, %17 : vector<20x64xf32>
    %cst_23 = arith.constant dense<0.000000e+00> : vector<64xf32>
    %25 = vector.multi_reduction <add>, %24, %cst_23 [0] : vector<20x64xf32> to vector<64xf32>
    %26 = vector.shape_cast %25 : vector<64xf32> to vector<1x64xf32>
    %27 = vector.shape_cast %26 : vector<1x64xf32> to vector<1x1x64xf32>
    %c0_24 = arith.constant 0 : index
    %c0_25 = arith.constant 0 : index
    %c0_26 = arith.constant 0 : index
    %28 = vector.load %arg8[%c0_24, %c0_25, %c0_26] : memref<1x1x64xf32, #tpu.memory_space<vmem>>, vector<1x1x64xf32>
    tpu.vector_store %arg8[%c0_24, %c0_25, %c0_26], %27 {strides = array<i32>} : memref<1x1x64xf32, #tpu.memory_space<vmem>>, vector<1x1x64xf32>,
    return
  }
  func.func @transform_0(%arg0: i32) -> (i32, i32, i32) {
    %c0_i32 = arith.constant 0 : i32
    %c0_i32_0 = arith.constant 0 : i32
    %c0_i32_1 = arith.constant 0 : i32
    return %arg0, %c0_i32, %c0_i32_0 : i32, i32, i32
  }
  func.func @transform_1(%arg0: i32) -> (i32, i32) {
    %c0_i32 = arith.constant 0 : i32
    %c0_i32_0 = arith.constant 0 : i32
    %c0_i32_1 = arith.constant 0 : i32
    return %c0_i32, %c0_i32_0 : i32, i32
  }
  func.func @transform_2(%arg0: i32) -> (i32, i32) {
    %c0_i32 = arith.constant 0 : i32
    %c0_i32_0 = arith.constant 0 : i32
    %c0_i32_1 = arith.constant 0 : i32
    return %c0_i32, %c0_i32_0 : i32, i32
  }
  func.func @transform_3(%arg0: i32) -> (i32, i32) {
    %c0_i32 = arith.constant 0 : i32
    %c0_i32_0 = arith.constant 0 : i32
    %c0_i32_1 = arith.constant 0 : i32
    return %c0_i32, %c0_i32_0 : i32, i32
  }
  func.func @transform_4(%arg0: i32) -> (i32, i32) {
    %c0_i32 = arith.constant 0 : i32
    %c0_i32_0 = arith.constant 0 : i32
    %c0_i32_1 = arith.constant 0 : i32
    return %c0_i32, %c0_i32_0 : i32, i32
  }
  func.func @transform_5(%arg0: i32) -> (i32, i32, i32) {
    %c0_i32 = arith.constant 0 : i32
    %c0_i32_0 = arith.constant 0 : i32
    %c0_i32_1 = arith.constant 0 : i32
    return %arg0, %c0_i32, %c0_i32_0 : i32, i32, i32
  }
  func.func @transform_6(%arg0: i32) -> (i32, i32, i32) {
    %c0_i32 = arith.constant 0 : i32
    %c0_i32_0 = arith.constant 0 : i32
    %c0_i32_1 = arith.constant 0 : i32
    return %arg0, %c0_i32, %c0_i32_0 : i32, i32, i32
  }
  func.func @transform_7(%arg0: i32) -> (i32, i32, i32) {
    %c0_i32 = arith.constant 0 : i32
    %c0_i32_0 = arith.constant 0 : i32
    %c0_i32_1 = arith.constant 0 : i32
    return %arg0, %c0_i32, %c0_i32_0 : i32, i32, i32
  }
}

</mosaic_0001>

<llo_original>
// kernel: tpu_custom_call.1
$region0: #{tpu_custom_call.1}
  #allocation0 [shape = 'u32[]', space=smem, size = 0x4, offset = 0x4, fixed_abs, tag = 'smem constant byte address 0x4 - core index']
  #allocation1 [shape = 'u32[144,128]{1,0:T(1,128)}', space=vmem, size = 0x12000, scoped, tag = 'internal scratch']
  %s0 = inlined_call_operand.vmem [shape: f32[2,22,24], index: 0, kind: input, shape index: {}]
  %s1 = inlined_call_operand.vmem [shape: f32[24,32], index: 1, kind: input, shape index: {}]
  %s2 = inlined_call_operand.hbm [shape: f32[24,32], index: 2, kind: input, shape index: {}]
  %s3 = inlined_call_operand.vmem [shape: f32[32,64], index: 3, kind: input, shape index: {}]
  %s4 = inlined_call_operand.vmem [shape: f32[32,64], index: 4, kind: input, shape index: {}]
  %s5 = inlined_call_operand.vmem [shape: f32[2,20,64], index: 5, kind: output, shape index: {0}]
  %s6 = inlined_call_operand.hbm [shape: f32[2,1,64], index: 6, kind: output, shape index: {1}]
  %s7 = inlined_call_operand.hbm [shape: f32[2,1,64], index: 7, kind: output, shape index: {2}]
  %8 = xla_tuple %s5, %s6, %s7
  %s9 = sld [smem:[#allocation0]]
  $region73: #{tpu_custom_call.1} parent=0
    _
  %s11 = ssub.s32 1, %s9
  %s12 = scalar_select 0, %s11, %s9
  $region1: #{tpu_custom_call.1} parent=0
    #allocation2 [shape = 'u8[12288]{0}', space=vmem, size = 0x3000, scoped, tag = 'input window, operand 2, single buffered']
    #allocation3 [shape = 's32[2]{0}', space=sflag, size = 0x8, scoped, tag = 'scoped memory for tpu_custom_call.1']
    #allocation4 [shape = 's32[2]{0}', space=sflag, size = 0x8, scoped, tag = 'scoped memory for tpu_custom_call.1']
    #allocation5 [shape = 'u8[1024]{0}', space=vmem, size = 0x400, scoped, tag = 'output window, operand 1']
    #allocation6 [shape = 'u8[1024]{0}', space=vmem, size = 0x400, scoped, tag = 'output window, operand 2']
    #allocation7 [shape = 's32[2]{0}', space=sflag, size = 0x8, scoped, tag = 'scoped memory for tpu_custom_call.1']
    %13 = vsyncpa [#allocation3], 0
    %14 = vsyncpa [#allocation4], 0
    %s15 = scalar_lea.sflag [#allocation4], 1
    %16 = vsyncpa %s15, 0
    %17 = vsyncpa [#allocation7], 0
    %s18 = scalar_lea.sflag [#allocation7], 1
    %19 = vsyncpa %s18, 0
    loop: start=0, step=1, limit=4
    $region2: #{tpu_custom_call.1} parent=1 // loop_pre_header
      _
    $region3: #{tpu_custom_call.1} parent=1 // loop_header
      %s21 = sphi 0, %s25
      %p22 = scmp.ge.s32.totalorder %s21, 4
      %s31 = sphi 0, %s33
      %s34 = sphi 0, %s31
      %s35 = sphi 0, %s34
      %s51 = sphi 0, %s35
      %s55 = sphi 0, %s55
      %s57 = sphi 0, %s55
      %s58 = sphi 0, %s57
      %s72 = sphi 0, %s58
      %s76 = sphi 0, %s76
      %s78 = sphi 0, %s76
      %s79 = sphi 0, %s78
      %s93 = sphi 0, %s79
      %s97 = sphi 0, %s97
      %s99 = sphi 0, %s97
      %s100 = sphi 0, %s99
      %s114 = sphi 0, %s100
      %s118 = sphi 0, %s118
      %s120 = sphi 0, %s118
      %s121 = sphi 0, %s120
      %s135 = sphi 0, %s121
      %s141 = sphi 0, %s143
      %s144 = sphi 0, %s141
      %s145 = sphi 0, %s144
      %s161 = sphi 0, %s145
      %s167 = sphi 0, %s169
      %s170 = sphi 0, %s167
      %s171 = sphi 0, %s170
      %s187 = sphi 0, %s171
      %s193 = sphi 0, %s195
      %s196 = sphi 0, %s193
      %s197 = sphi 0, %s196
      %s213 = sphi 0, %s197
    $region4: #{tpu_custom_call.1} parent=1 // loop_header_branch
      %24 = sbr.rel (%p22) target = $region8
    $region5: #{tpu_custom_call.1} parent=1 // loop_body
      %s26 = ssub.s32 %s21, 1
      %s27 = ssub.s32 %s21, 2
      %s28 = sadd.s32 %s21, 1
      %s29 = ssub.s32 %s21, %s28
      %p30 = scmp.eq.s32.totalorder %s29, 0
      %s32 = sadd.s32 %s31, 1
      %s33 = scalar_select %p30, %s31, %s32
      %p36 = pneg %p30
      %p37 = scmp.eq.s32.totalorder %s21, 1
      %p38 = por %p36, %p37
      %p39 = scmp.ne.s32.totalorder %s31, %s34
      %p40 = scmp.eq.s32.totalorder %s21, 0
      %p41 = por %p39, %p40
      %p42 = scmp.ne.s32.totalorder %s31, %s34
      %p43 = scmp.eq.s32.totalorder %s26, 1
      %p44 = por %p42, %p43
      %p45 = scmp.ne.s32.totalorder %s34, %s35
      %p46 = scmp.eq.s32.totalorder %s26, 0
      %p47 = por %p45, %p46
      %p48 = scmp.ne.s32.totalorder %s34, %s35
      %p49 = scmp.eq.s32.totalorder %s27, 1
      %p50 = por %p48, %p49
      %p52 = scmp.ne.s32.totalorder %s35, %s51
      %p53 = scmp.eq.s32.totalorder %s27, 0
      %p54 = por %p52, %p53
      %s56 = sadd.s32 %s55, 1
      %p59 = scmp.eq.s32.totalorder %s21, 1
      %p60 = scmp.ne.s32.totalorder %s55, %s57
      %p61 = scmp.eq.s32.totalorder %s21, 0
      %p62 = por %p60, %p61
      %p63 = scmp.ne.s32.totalorder %s55, %s57
      %p64 = scmp.eq.s32.totalorder %s26, 1
      %p65 = por %p63, %p64
      %p66 = scmp.ne.s32.totalorder %s57, %s58
      %p67 = scmp.eq.s32.totalorder %s26, 0
      %p68 = por %p66, %p67
      %p69 = scmp.ne.s32.totalorder %s57, %s58
      %p70 = scmp.eq.s32.totalorder %s27, 1
      %p71 = por %p69, %p70
      %p73 = scmp.ne.s32.totalorder %s58, %s72
      %p74 = scmp.eq.s32.totalorder %s27, 0
      %p75 = por %p73, %p74
      %s77 = sadd.s32 %s76, 1
      %p80 = scmp.eq.s32.totalorder %s21, 1
      %p81 = scmp.ne.s32.totalorder %s76, %s78
      %p82 = scmp.eq.s32.totalorder %s21, 0
      %p83 = por %p81, %p82
      %p84 = scmp.ne.s32.totalorder %s76, %s78
      %p85 = scmp.eq.s32.totalorder %s26, 1
      %p86 = por %p84, %p85
      %p87 = scmp.ne.s32.totalorder %s78, %s79
      %p88 = scmp.eq.s32.totalorder %s26, 0
      %p89 = por %p87, %p88
      %p90 = scmp.ne.s32.totalorder %s78, %s79
      %p91 = scmp.eq.s32.totalorder %s27, 1
      %p92 = por %p90, %p91
      %p94 = scmp.ne.s32.totalorder %s79, %s93
      %p95 = scmp.eq.s32.totalorder %s27, 0
      %p96 = por %p94, %p95
      %s98 = sadd.s32 %s97, 1
      %p101 = scmp.eq.s32.totalorder %s21, 1
      %p102 = scmp.ne.s32.totalorder %s97, %s99
      %p103 = scmp.eq.s32.totalorder %s21, 0
      %p104 = por %p102, %p103
      %p105 = scmp.ne.s32.totalorder %s97, %s99
      %p106 = scmp.eq.s32.totalorder %s26, 1
      %p107 = por %p105, %p106
      %p108 = scmp.ne.s32.totalorder %s99, %s100
      %p109 = scmp.eq.s32.totalorder %s26, 0
      %p110 = por %p108, %p109
      %p111 = scmp.ne.s32.totalorder %s99, %s100
      %p112 = scmp.eq.s32.totalorder %s27, 1
      %p113 = por %p111, %p112
      %p115 = scmp.ne.s32.totalorder %s100, %s114
      %p116 = scmp.eq.s32.totalorder %s27, 0
      %p117 = por %p115, %p116
      %s119 = sadd.s32 %s118, 1
      %p122 = scmp.eq.s32.totalorder %s21, 1
      %p123 = scmp.ne.s32.totalorder %s118, %s120
      %p124 = scmp.eq.s32.totalorder %s21, 0
      %p125 = por %p123, %p124
      %p126 = scmp.ne.s32.totalorder %s118, %s120
      %p127 = scmp.eq.s32.totalorder %s26, 1
      %p128 = por %p126, %p127
      %p129 = scmp.ne.s32.totalorder %s120, %s121
      %p130 = scmp.eq.s32.totalorder %s26, 0
      %p131 = por %p129, %p130
      %p132 = scmp.ne.s32.totalorder %s120, %s121
      %p133 = scmp.eq.s32.totalorder %s27, 1
      %p134 = por %p132, %p133
      %p136 = scmp.ne.s32.totalorder %s121, %s135
      %p137 = scmp.eq.s32.totalorder %s27, 0
      %p138 = por %p136, %p137
      %s139 = ssub.s32 %s21, %s28
      %p140 = scmp.eq.s32.totalorder %s139, 0
      %s142 = sadd.s32 %s141, 1
      %s143 = scalar_select %p140, %s141, %s142
      %p146 = pneg %p140
      %p147 = scmp.eq.s32.totalorder %s21, 1
      %p148 = por %p146, %p147
      %p149 = scmp.ne.s32.totalorder %s141, %s144
      %p150 = scmp.eq.s32.totalorder %s21, 0
      %p151 = por %p149, %p150
      %p152 = scmp.ne.s32.totalorder %s141, %s144
      %p153 = scmp.eq.s32.totalorder %s26, 1
      %p154 = por %p152, %p153
      %p155 = scmp.ne.s32.totalorder %s144, %s145
      %p156 = scmp.eq.s32.totalorder %s26, 0
      %p157 = por %p155, %p156
      %p158 = scmp.ne.s32.totalorder %s144, %s145
      %p159 = scmp.eq.s32.totalorder %s27, 1
      %p160 = por %p158, %p159
      %p162 = scmp.ne.s32.totalorder %s145, %s161
      %p163 = scmp.eq.s32.totalorder %s27, 0
      %p164 = por %p162, %p163
      %s165 = ssub.s32 %s21, %s28
      %p166 = scmp.eq.s32.totalorder %s165, 0
      %s168 = sadd.s32 %s167, 1
      %s169 = scalar_select %p166, %s167, %s168
      %p172 = pneg %p166
      %p173 = scmp.eq.s32.totalorder %s21, 1
      %p174 = por %p172, %p173
      %p175 = scmp.ne.s32.totalorder %s167, %s170
      %p176 = scmp.eq.s32.totalorder %s21, 0
      %p177 = por %p175, %p176
      %p178 = scmp.ne.s32.totalorder %s167, %s170
      %p179 = scmp.eq.s32.totalorder %s26, 1
      %p180 = por %p178, %p179
      %p181 = scmp.ne.s32.totalorder %s170, %s171
      %p182 = scmp.eq.s32.totalorder %s26, 0
      %p183 = por %p181, %p182
      %p184 = scmp.ne.s32.totalorder %s170, %s171
      %p185 = scmp.eq.s32.totalorder %s27, 1
      %p186 = por %p184, %p185
      %p188 = scmp.ne.s32.totalorder %s171, %s187
      %p189 = scmp.eq.s32.totalorder %s27, 0
      %p190 = por %p188, %p189
      %s191 = ssub.s32 %s21, %s28
      %p192 = scmp.eq.s32.totalorder %s191, 0
      %s194 = sadd.s32 %s193, 1
      %s195 = scalar_select %p192, %s193, %s194
      %p198 = pneg %p192
      %p199 = scmp.eq.s32.totalorder %s21, 1
      %p200 = por %p198, %p199
      %p201 = scmp.ne.s32.totalorder %s193, %s196
      %p202 = scmp.eq.s32.totalorder %s21, 0
      %p203 = por %p201, %p202
      %p204 = scmp.ne.s32.totalorder %s193, %s196
      %p205 = scmp.eq.s32.totalorder %s26, 1
      %p206 = por %p204, %p205
      %p207 = scmp.ne.s32.totalorder %s196, %s197
      %p208 = scmp.eq.s32.totalorder %s26, 0
      %p209 = por %p207, %p208
      %p210 = scmp.ne.s32.totalorder %s196, %s197
      %p211 = scmp.eq.s32.totalorder %s27, 1
      %p212 = por %p210, %p211
      %p214 = scmp.ne.s32.totalorder %s197, %s213
      %p215 = scmp.eq.s32.totalorder %s27, 0
      %p216 = por %p214, %p215
      %p217 = scmp.le.s32.totalorder 1, %s21
      %p218 = scmp.lt.s32.totalorder %s21, 3
      %p219 = pnand %p217, %p218
      %p220 = pneg %p219
      // Predicated region
      $region9: #{tpu_custom_call.1} parent=5 // pred_check
        _
      $region10: #{tpu_custom_call.1} parent=5 // pred_check_branch
        %222 = sbr.rel (%p219) target = $region12
      $region11: #{tpu_custom_call.1} parent=5 // pred_region
        %s223 = ssub.s32 %s21, 1
        // Predicated region
        $region13: #{tpu_custom_call.1} parent=11 // pred_check
          %p224 = pneg %p68
        $region14: #{tpu_custom_call.1} parent=11 // pred_check_branch
          %226 = sbr.rel (%p224) target = $region16
        $region15: #{tpu_custom_call.1} parent=11 // pred_region
          _
        $region16: #{tpu_custom_call.1} parent=11 // pred_fallthru
          _
        // Predicated region
        $region17: #{tpu_custom_call.1} parent=11 // pred_check
          %p227 = pneg %p89
        $region18: #{tpu_custom_call.1} parent=11 // pred_check_branch
          %229 = sbr.rel (%p227) target = $region20
        $region19: #{tpu_custom_call.1} parent=11 // pred_region
          %s231 = ssub.s32 384, 384
          %232 = vsyncadd [#allocation3], %s231
          %s233 = sshll.u32 [#allocation2], 4
          %s234 = int_to_ptr.vmem [resolvable:$true] %s233
          %239 = dma.hbm_to_vmem [thread:$0]  %s2, 384, %s234, [#allocation3], 128, 128, 8
        $region20: #{tpu_custom_call.1} parent=11 // pred_fallthru
          _
        // Predicated region
        $region21: #{tpu_custom_call.1} parent=11 // pred_check
          %p240 = pneg %p110
        $region22: #{tpu_custom_call.1} parent=11 // pred_check_branch
          %242 = sbr.rel (%p240) target = $region24
        $region23: #{tpu_custom_call.1} parent=11 // pred_region
          _
        $region24: #{tpu_custom_call.1} parent=11 // pred_fallthru
          _
        // Predicated region
        $region25: #{tpu_custom_call.1} parent=11 // pred_check
          %p243 = pneg %p131
        $region26: #{tpu_custom_call.1} parent=11 // pred_check_branch
          %245 = sbr.rel (%p243) target = $region28
        $region27: #{tpu_custom_call.1} parent=11 // pred_region
          _
        $region28: #{tpu_custom_call.1} parent=11 // pred_fallthru
          _
      $region12: #{tpu_custom_call.1} parent=5 // pred_fallthru
        _
      %p246 = scmp.lt.s32.totalorder %s21, 2
      // Predicated region
      $region29: #{tpu_custom_call.1} parent=5 // pred_check
        %p247 = pneg %p246
      $region30: #{tpu_custom_call.1} parent=5 // pred_check_branch
        %249 = sbr.rel (%p247) target = $region32
      $region31: #{tpu_custom_call.1} parent=5 // pred_region
        // Predicated region
        $region33: #{tpu_custom_call.1} parent=31 // pred_check
          %p250 = pneg %p41
        $region34: #{tpu_custom_call.1} parent=31 // pred_check_branch
          %252 = sbr.rel (%p250) target = $region36
        $region35: #{tpu_custom_call.1} parent=31 // pred_region
          %p253 = scmp.lt.s32.totalorder %s21, 1
          %s254 = scalar_select %p253, %s21, 1
          %s255 = smul.addr %s254, 3
          %s256 = smul.addr %s255, 8
          %s257 = scalar_lea.vmem %s0, %s256
        $region36: #{tpu_custom_call.1} parent=31 // pred_fallthru
          _
      $region32: #{tpu_custom_call.1} parent=5 // pred_fallthru
        _
      %p258 = scmp.le.s32.totalorder 1, %s21
      %p259 = scmp.lt.s32.totalorder %s21, 3
      %p260 = pnand %p258, %p259
      %p261 = pneg %p260
      // Predicated region
      $region37: #{tpu_custom_call.1} parent=5 // pred_check
        _
      $region38: #{tpu_custom_call.1} parent=5 // pred_check_branch
        %263 = sbr.rel (%p260) target = $region40
      $region39: #{tpu_custom_call.1} parent=5 // pred_region
        %s264 = ssub.s32 %s21, 1
        // Predicated region
        $region41: #{tpu_custom_call.1} parent=39 // pred_check
          %p265 = pneg %p89
        $region42: #{tpu_custom_call.1} parent=39 // pred_check_branch
          %267 = sbr.rel (%p265) target = $region44
        $region43: #{tpu_custom_call.1} parent=39 // pred_region
          %268 = dma.done [#allocation3], 384
        $region44: #{tpu_custom_call.1} parent=39 // pred_fallthru
          _
        %p269 = scmp.lt.s32.totalorder %s26, 1
        %s270 = scalar_select %p269, %s26, 1
        %s271 = smul.addr %s270, 3
        %s272 = smul.addr %s271, 8
        %s273 = scalar_lea.vmem %s0, %s272
        %p274 = pneg %p47
        %p275 = pneg %p44
        %p276 = pneg %p68
        %p277 = pneg %p65
        %p278 = pneg %p89
        %p279 = pneg %p86
        %p280 = pneg %p110
        %p281 = pneg %p107
        %p282 = pneg %p131
        %p283 = pneg %p128
        %p284 = pneg %p157
        %p285 = pneg %p154
        %p286 = scmp.lt.s32.totalorder %s26, 1
        %s287 = scalar_select %p286, %s26, 1
        %s288 = smul.addr %s287, 3
        %s289 = smul.addr %s288, 8
        %s290 = scalar_lea.vmem %s5, %s289
        %p291 = pneg %p183
        %p292 = pneg %p180
        %s293 = sand.u32 %s170, 1
        %s294 = scalar_lea.sflag [#allocation4], %s293
        %s295 = sand.u32 %s170, 1
        %s296 = scalar_lea.vmem [#allocation5], %s295
        %p297 = pneg %p209
        %p298 = pneg %p206
        %s299 = sand.u32 %s196, 1
        %s300 = scalar_lea.sflag [#allocation7], %s299
        %s301 = sand.u32 %s196, 1
        %s302 = scalar_lea.vmem [#allocation6], %s301
        %p303 = scmp.lt.s32.totalorder %s26, 1
        %s304 = scalar_select %p303, %s26, 1
        %s305 = smul.addr %s304, 3
        %s306 = smul.addr %s305, 8
        %s307 = scalar_lea.vmem %s0, %s306
        %p308 = scmp.lt.s32.totalorder %s26, 1
        %s309 = scalar_select %p308, %s26, 1
        %s310 = smul.addr %s309, 3
        %s311 = smul.addr %s310, 8
        %s312 = scalar_lea.vmem %s5, %s311
        %v313 = vld [vmem:[%s307] sm:$0xff]
        %v314 = vld [vmem:[%s307 + $0x8] sm:$0xff]
        %v315 = vld [vmem:[%s307 + $0x10] sm:$0x1f]
        %v316 = vld [vmem:[%s307 + $0x1] sm:$0xff]
        %v317 = vld [vmem:[%s307 + $0x9] sm:$0xff]
        %v318 = vld [vmem:[%s307 + $0x11] sm:$0x1f]
        %v319 = vld [vmem:[%s1] sm:$0xff]
        %v320 = vld [vmem:[%s1 + $0x8] sm:$0xff]
        %v321 = vld [vmem:[%s1 + $0x10] sm:$0xff]
        %v322 = vld [vmem:[#allocation2] sm:$0xff]
        %v323 = vld [vmem:[#allocation2 + $0x8] sm:$0xff]
        %v324 = vld [vmem:[#allocation2 + $0x10] sm:$0xff]
        %vm325 = vcmask 195584
        %v327 = vsel %vm325, %v316, 0
        %v330 = vsel %vm325, %v317, 0
        %v333 = vsel %vm325, %v318, 0
        %335 = vmatprep.subr.mxu0 0.0
        %336 = vmatpush1.msra.mxu0 %v322
        %337 = vmatprep.subr.mxu0 0.0
        %338 = vmatpush1.msra.mxu0 %v323
        %339 = vmatprep.subr.mxu0 0.0
        %340 = vmatpush1.msra.mxu0 %v324
        %341 = vmatprep.subr.mxu0 0.0
        %342 = vmatpush1.msra.mxu0 0.0
        %343 = vmatprep.subr.mxu0 0.0
        %344 = vmatpush1.msra.mxu0 0.0
        %345 = vmatprep.subr.mxu0 0.0
        %346 = vmatpush1.msra.mxu0 0.0
        %347 = vmatprep.subr.mxu0 0.0
        %348 = vmatpush1.msra.mxu0 0.0
        %349 = vmatprep.subr.mxu0 0.0
        %350 = vmatpush1.msra.mxu0 0.0
        %351 = vmatprep.subr.mxu0 0.0
        %352 = vmatpush1.msra.mxu0 0.0
        %353 = vmatprep.subr.mxu0 0.0
        %354 = vmatpush1.msra.mxu0 0.0
        %355 = vmatprep.subr.mxu0 0.0
        %356 = vmatpush1.msra.mxu0 0.0
        %357 = vmatprep.subr.mxu0 0.0
        %358 = vmatpush1.msra.mxu0 0.0
        %359 = vmatprep.subr.mxu0 0.0
        %360 = vmatpush1.msra.mxu0 0.0
        %361 = vmatprep.subr.mxu0 0.0
        %362 = vmatpush1.msra.mxu0 0.0
        %363 = vmatprep.subr.mxu0 0.0
        %364 = vmatpush1.msra.mxu0 0.0
        %365 = vmatprep.subr.mxu0 0.0
        %366 = vmatpush1.msra.mxu0 0.0
        %367 = vmatprep.subr.mxu0 0.0
        %368 = vmatpush1.msra.mxu0 0.0
        %369 = vmatprep.subr.mxu0 0.0
        %370 = vmatpush1.msra.mxu0 0.0
        %371 = vmatprep.subr.mxu0 0.0
        %372 = vmatpush1.msra.mxu0 0.0
        %373 = vmatprep.subr.mxu0 0.0
        %374 = vmatpush1.msra.mxu0 0.0
        %375 = vmatprep.subr.mxu0 0.0
        %376 = vmatpush1.msra.mxu0 0.0
        %377 = vmatprep.subr.mxu0 0.0
        %378 = vmatpush1.msra.mxu0 0.0
        %379 = vmatprep.subr.mxu0 0.0
        %380 = vmatpush1.msra.mxu0 0.0
        %381 = vmatprep.subr.mxu0 0.0
        %382 = vmatpush1.msra.mxu0 0.0
        %383 = vmatprep.subr.mxu0 0.0
        %384 = vmatpush1.msra.mxu0 0.0
        %385 = vmatprep.subr.mxu0 0.0
        %386 = vmatpush1.msra.mxu0 0.0
        %387 = vmatprep.subr.mxu0 0.0
        %388 = vmatpush1.msra.mxu0 0.0
        %389 = vmatprep.subr.mxu0 0.0
        %390 = vmatpush1.msra.mxu0 0.0
        %391 = vmatprep.subr.mxu0 0.0
        %392 = vmatpush1.msra.mxu0 0.0
        %393 = vmatprep.subr.mxu0 0.0
        %394 = vmatpush1.msra.mxu0 0.0
        %395 = vmatprep.subr.mxu0 0.0
        %396 = vmatpush1.msra.mxu0 0.0
        %397 = vmatprep.subr.mxu0 0.0
        %398 = vmatpush1.msra.mxu0 0.0
        %399 = vmatprep.mubr.f32.mxu0 0.0
        %400 = vmatmul.mubr.f32.gmra.mrb[0].mxu0 %v327
        %v401 = vpop.f32.mrb[0].mxu0
        %v402 = vadd.f32 0.0, %v401
        %v403 = vpop.f32.mrb[0].mxu0
        %404 = vmatprep.mubr.f32.mxu0 0.0
        %405 = vmatmul.mubr.f32.gmra.mrb[0].mxu0 %v330
        %v406 = vpop.f32.mrb[0].mxu0
        %v407 = vadd.f32 0.0, %v406
        %v408 = vpop.f32.mrb[0].mxu0
        %409 = vmatprep.mubr.f32.mxu0 0.0
        %410 = vmatmul.mubr.f32.gmra.mrb[0].mxu0 %v333
        %v411 = vpop.f32.mrb[0].mxu0
        %v412 = vadd.f32 0.0, %v411
        %v413 = vpop.f32.mrb[0].mxu0
        %414 = vdwg.mxu0
        %v416 = vsel %vm325, %v313, 0
        %v419 = vsel %vm325, %v314, 0
        %v422 = vsel %vm325, %v315, 0
        %424 = vmatprep.subr.mxu0 0.0
        %425 = vmatpush1.msra.mxu0 %v319
        %426 = vmatprep.subr.mxu0 0.0
        %427 = vmatpush1.msra.mxu0 %v320
        %428 = vmatprep.subr.mxu0 0.0
        %429 = vmatpush1.msra.mxu0 %v321
        %430 = vmatprep.subr.mxu0 0.0
        %431 = vmatpush1.msra.mxu0 0.0
        %432 = vmatprep.subr.mxu0 0.0
        %433 = vmatpush1.msra.mxu0 0.0
        %434 = vmatprep.subr.mxu0 0.0
        %435 = vmatpush1.msra.mxu0 0.0
        %436 = vmatprep.subr.mxu0 0.0
        %437 = vmatpush1.msra.mxu0 0.0
        %438 = vmatprep.subr.mxu0 0.0
        %439 = vmatpush1.msra.mxu0 0.0
        %440 = vmatprep.subr.mxu0 0.0
        %441 = vmatpush1.msra.mxu0 0.0
        %442 = vmatprep.subr.mxu0 0.0
        %443 = vmatpush1.msra.mxu0 0.0
        %444 = vmatprep.subr.mxu0 0.0
        %445 = vmatpush1.msra.mxu0 0.0
        %446 = vmatprep.subr.mxu0 0.0
        %447 = vmatpush1.msra.mxu0 0.0
        %448 = vmatprep.subr.mxu0 0.0
        %449 = vmatpush1.msra.mxu0 0.0
        %450 = vmatprep.subr.mxu0 0.0
        %451 = vmatpush1.msra.mxu0 0.0
        %452 = vmatprep.subr.mxu0 0.0
        %453 = vmatpush1.msra.mxu0 0.0
        %454 = vmatprep.subr.mxu0 0.0
        %455 = vmatpush1.msra.mxu0 0.0
        %456 = vmatprep.subr.mxu0 0.0
        %457 = vmatpush1.msra.mxu0 0.0
        %458 = vmatprep.subr.mxu0 0.0
        %459 = vmatpush1.msra.mxu0 0.0
        %460 = vmatprep.subr.mxu0 0.0
        %461 = vmatpush1.msra.mxu0 0.0
        %462 = vmatprep.subr.mxu0 0.0
        %463 = vmatpush1.msra.mxu0 0.0
        %464 = vmatprep.subr.mxu0 0.0
        %465 = vmatpush1.msra.mxu0 0.0
        %466 = vmatprep.subr.mxu0 0.0
        %467 = vmatpush1.msra.mxu0 0.0
        %468 = vmatprep.subr.mxu0 0.0
        %469 = vmatpush1.msra.mxu0 0.0
        %470 = vmatprep.subr.mxu0 0.0
        %471 = vmatpush1.msra.mxu0 0.0
        %472 = vmatprep.subr.mxu0 0.0
        %473 = vmatpush1.msra.mxu0 0.0
        %474 = vmatprep.subr.mxu0 0.0
        %475 = vmatpush1.msra.mxu0 0.0
        %476 = vmatprep.subr.mxu0 0.0
        %477 = vmatpush1.msra.mxu0 0.0
        %478 = vmatprep.subr.mxu0 0.0
        %479 = vmatpush1.msra.mxu0 0.0
        %480 = vmatprep.subr.mxu0 0.0
        %481 = vmatpush1.msra.mxu0 0.0
        %482 = vmatprep.subr.mxu0 0.0
        %483 = vmatpush1.msra.mxu0 0.0
        %484 = vmatprep.subr.mxu0 0.0
        %485 = vmatpush1.msra.mxu0 0.0
        %486 = vmatprep.subr.mxu0 0.0
        %487 = vmatpush1.msra.mxu0 0.0
        %488 = vmatprep.mubr.f32.mxu0 0.0
        %489 = vmatmul.mubr.f32.gmra.mrb[0].mxu0 %v416
        %v490 = vpop.f32.mrb[0].mxu0
        %v491 = vadd.f32 %v402, %v490
        %v492 = vpop.f32.mrb[0].mxu0
        %493 = vmatprep.mubr.f32.mxu0 0.0
        %494 = vmatmul.mubr.f32.gmra.mrb[0].mxu0 %v419
        %v495 = vpop.f32.mrb[0].mxu0
        %v496 = vadd.f32 %v407, %v495
        %v497 = vpop.f32.mrb[0].mxu0
        %498 = vmatprep.mubr.f32.mxu0 0.0
        %499 = vmatmul.mubr.f32.gmra.mrb[0].mxu0 %v422
        %v500 = vpop.f32.mrb[0].mxu0
        %v501 = vadd.f32 %v412, %v500
        %v502 = vpop.f32.mrb[0].mxu0
        %503 = vdwg.mxu0
        %v504 = vmax.f32 %v491, 0.0
        %v505 = vmax.f32 %v496, 0.0
        %v506 = vmax.f32 %v501, 0.0
        %v507 = vld [vmem:[%s3] sm:$0xff]
        %v508 = vld [vmem:[%s3 + $0x8] sm:$0xff]
        %v509 = vld [vmem:[%s3 + $0x10] sm:$0xff]
        %v510 = vld [vmem:[%s3 + $0x18] sm:$0xff]
        %v511 = vld [vmem:[%s4] sm:$0xff]
        %v512 = vld [vmem:[%s4 + $0x8] sm:$0xff]
        %v513 = vld [vmem:[%s4 + $0x10] sm:$0xff]
        %v514 = vld [vmem:[%s4 + $0x18] sm:$0xff]
        %vm518 = vcmask 1046528
        %v519 = vrot.slane %v504, 1
        %v520 = vrot.slane %v505, 1
        %v521 = vsel %vm518, %v519, %v520
        %v522 = vrot.slane %v506, 1
        %v523 = vsel %vm518, %v520, %v522
        %vm524 = vcmask 261120
        %v525 = vsel %vm524, %v521, 0
        %v527 = vsel %vm524, %v523, 0
        %v529 = vsel %vm524, %v522, 0
        %531 = vmatprep.subr.mxu0 0.0
        %532 = vmatpush1.msra.mxu0 %v511
        %533 = vmatprep.subr.mxu0 0.0
        %534 = vmatpush1.msra.mxu0 %v512
        %535 = vmatprep.subr.mxu0 0.0
        %536 = vmatpush1.msra.mxu0 %v513
        %537 = vmatprep.subr.mxu0 0.0
        %538 = vmatpush1.msra.mxu0 %v514
        %539 = vmatprep.subr.mxu0 0.0
        %540 = vmatpush1.msra.mxu0 0.0
        %541 = vmatprep.subr.mxu0 0.0
        %542 = vmatpush1.msra.mxu0 0.0
        %543 = vmatprep.subr.mxu0 0.0
        %544 = vmatpush1.msra.mxu0 0.0
        %545 = vmatprep.subr.mxu0 0.0
        %546 = vmatpush1.msra.mxu0 0.0
        %547 = vmatprep.subr.mxu0 0.0
        %548 = vmatpush1.msra.mxu0 0.0
        %549 = vmatprep.subr.mxu0 0.0
        %550 = vmatpush1.msra.mxu0 0.0
        %551 = vmatprep.subr.mxu0 0.0
        %552 = vmatpush1.msra.mxu0 0.0
        %553 = vmatprep.subr.mxu0 0.0
        %554 = vmatpush1.msra.mxu0 0.0
        %555 = vmatprep.subr.mxu0 0.0
        %556 = vmatpush1.msra.mxu0 0.0
        %557 = vmatprep.subr.mxu0 0.0
        %558 = vmatpush1.msra.mxu0 0.0
        %559 = vmatprep.subr.mxu0 0.0
        %560 = vmatpush1.msra.mxu0 0.0
        %561 = vmatprep.subr.mxu0 0.0
        %562 = vmatpush1.msra.mxu0 0.0
        %563 = vmatprep.subr.mxu0 0.0
        %564 = vmatpush1.msra.mxu0 0.0
        %565 = vmatprep.subr.mxu0 0.0
        %566 = vmatpush1.msra.mxu0 0.0
        %567 = vmatprep.subr.mxu0 0.0
        %568 = vmatpush1.msra.mxu0 0.0
        %569 = vmatprep.subr.mxu0 0.0
        %570 = vmatpush1.msra.mxu0 0.0
        %571 = vmatprep.subr.mxu0 0.0
        %572 = vmatpush1.msra.mxu0 0.0
        %573 = vmatprep.subr.mxu0 0.0
        %574 = vmatpush1.msra.mxu0 0.0
        %575 = vmatprep.subr.mxu0 0.0
        %576 = vmatpush1.msra.mxu0 0.0
        %577 = vmatprep.subr.mxu0 0.0
        %578 = vmatpush1.msra.mxu0 0.0
        %579 = vmatprep.subr.mxu0 0.0
        %580 = vmatpush1.msra.mxu0 0.0
        %581 = vmatprep.subr.mxu0 0.0
        %582 = vmatpush1.msra.mxu0 0.0
        %583 = vmatprep.subr.mxu0 0.0
        %584 = vmatpush1.msra.mxu0 0.0
        %585 = vmatprep.subr.mxu0 0.0
        %586 = vmatpush1.msra.mxu0 0.0
        %587 = vmatprep.subr.mxu0 0.0
        %588 = vmatpush1.msra.mxu0 0.0
        %589 = vmatprep.subr.mxu0 0.0
        %590 = vmatpush1.msra.mxu0 0.0
        %591 = vmatprep.subr.mxu0 0.0
        %592 = vmatpush1.msra.mxu0 0.0
        %593 = vmatprep.subr.mxu0 0.0
        %594 = vmatpush1.msra.mxu0 0.0
        %595 = vmatprep.mubr.f32.mxu0 0.0
        %596 = vmatmul.mubr.f32.gmra.mrb[0].mxu0 %v525
        %v597 = vpop.f32.mrb[0].mxu0
        %v598 = vadd.f32 0.0, %v597
        %v599 = vpop.f32.mrb[0].mxu0
        %600 = vmatprep.mubr.f32.mxu0 0.0
        %601 = vmatmul.mubr.f32.gmra.mrb[0].mxu0 %v527
        %v602 = vpop.f32.mrb[0].mxu0
        %v603 = vadd.f32 0.0, %v602
        %v604 = vpop.f32.mrb[0].mxu0
        %605 = vmatprep.mubr.f32.mxu0 0.0
        %606 = vmatmul.mubr.f32.gmra.mrb[0].mxu0 %v529
        %v607 = vpop.f32.mrb[0].mxu0
        %v608 = vadd.f32 0.0, %v607
        %v609 = vpop.f32.mrb[0].mxu0
        %610 = vdwg.mxu0
        %v611 = vsel %vm524, %v504, 0
        %v613 = vsel %vm524, %v505, 0
        %v615 = vsel %vm524, %v506, 0
        %617 = vmatprep.subr.mxu0 0.0
        %618 = vmatpush1.msra.mxu0 %v507
        %619 = vmatprep.subr.mxu0 0.0
        %620 = vmatpush1.msra.mxu0 %v508
        %621 = vmatprep.subr.mxu0 0.0
        %622 = vmatpush1.msra.mxu0 %v509
        %623 = vmatprep.subr.mxu0 0.0
        %624 = vmatpush1.msra.mxu0 %v510
        %625 = vmatprep.subr.mxu0 0.0
        %626 = vmatpush1.msra.mxu0 0.0
        %627 = vmatprep.subr.mxu0 0.0
        %628 = vmatpush1.msra.mxu0 0.0
        %629 = vmatprep.subr.mxu0 0.0
        %630 = vmatpush1.msra.mxu0 0.0
        %631 = vmatprep.subr.mxu0 0.0
        %632 = vmatpush1.msra.mxu0 0.0
        %633 = vmatprep.subr.mxu0 0.0
        %634 = vmatpush1.msra.mxu0 0.0
        %635 = vmatprep.subr.mxu0 0.0
        %636 = vmatpush1.msra.mxu0 0.0
        %637 = vmatprep.subr.mxu0 0.0
        %638 = vmatpush1.msra.mxu0 0.0
        %639 = vmatprep.subr.mxu0 0.0
        %640 = vmatpush1.msra.mxu0 0.0
        %641 = vmatprep.subr.mxu0 0.0
        %642 = vmatpush1.msra.mxu0 0.0
        %643 = vmatprep.subr.mxu0 0.0
        %644 = vmatpush1.msra.mxu0 0.0
        %645 = vmatprep.subr.mxu0 0.0
        %646 = vmatpush1.msra.mxu0 0.0
        %647 = vmatprep.subr.mxu0 0.0
        %648 = vmatpush1.msra.mxu0 0.0
        %649 = vmatprep.subr.mxu0 0.0
        %650 = vmatpush1.msra.mxu0 0.0
        %651 = vmatprep.subr.mxu0 0.0
        %652 = vmatpush1.msra.mxu0 0.0
        %653 = vmatprep.subr.mxu0 0.0
        %654 = vmatpush1.msra.mxu0 0.0
        %655 = vmatprep.subr.mxu0 0.0
        %656 = vmatpush1.msra.mxu0 0.0
        %657 = vmatprep.subr.mxu0 0.0
        %658 = vmatpush1.msra.mxu0 0.0
        %659 = vmatprep.subr.mxu0 0.0
        %660 = vmatpush1.msra.mxu0 0.0
        %661 = vmatprep.subr.mxu0 0.0
        %662 = vmatpush1.msra.mxu0 0.0
        %663 = vmatprep.subr.mxu0 0.0
        %664 = vmatpush1.msra.mxu0 0.0
        %665 = vmatprep.subr.mxu0 0.0
        %666 = vmatpush1.msra.mxu0 0.0
        %667 = vmatprep.subr.mxu0 0.0
        %668 = vmatpush1.msra.mxu0 0.0
        %669 = vmatprep.subr.mxu0 0.0
        %670 = vmatpush1.msra.mxu0 0.0
        %671 = vmatprep.subr.mxu0 0.0
        %672 = vmatpush1.msra.mxu0 0.0
        %673 = vmatprep.subr.mxu0 0.0
        %674 = vmatpush1.msra.mxu0 0.0
        %675 = vmatprep.subr.mxu0 0.0
        %676 = vmatpush1.msra.mxu0 0.0
        %677 = vmatprep.subr.mxu0 0.0
        %678 = vmatpush1.msra.mxu0 0.0
        %679 = vmatprep.subr.mxu0 0.0
        %680 = vmatpush1.msra.mxu0 0.0
        %681 = vmatprep.mubr.f32.mxu0 0.0
        %682 = vmatmul.mubr.f32.gmra.mrb[0].mxu0 %v611
        %v683 = vpop.f32.mrb[0].mxu0
        %v684 = vadd.f32 %v598, %v683
        %v685 = vpop.f32.mrb[0].mxu0
        %686 = vmatprep.mubr.f32.mxu0 0.0
        %687 = vmatmul.mubr.f32.gmra.mrb[0].mxu0 %v613
        %v688 = vpop.f32.mrb[0].mxu0
        %v689 = vadd.f32 %v603, %v688
        %v690 = vpop.f32.mrb[0].mxu0
        %691 = vmatprep.mubr.f32.mxu0 0.0
        %692 = vmatmul.mubr.f32.gmra.mrb[0].mxu0 %v615
        %v693 = vpop.f32.mrb[0].mxu0
        %v694 = vadd.f32 %v608, %v693
        %v695 = vpop.f32.mrb[0].mxu0
        %696 = vdwg.mxu0
        %vm697 = vcmask 523264
        %698 = vst.msk [vmem:[%s312] sm:$0xff] %vm697, %v684
        %699 = vst.msk [vmem:[%s312 + $0x8] sm:$0xff] %vm697, %v689
        %vm700 = vcmask 519168
        %701 = vst.msk [vmem:[%s312 + $0x10] sm:$0xf] %vm700, %v694
        %v702 = vsel %vm697, %v684, 0.0
        %v703 = vsel %vm697, %v689, 0.0
        %v704 = vadd.f32 %v702, %v703
        %v705 = vsel %vm700, %v694, 0.0
        %v706 = vadd.f32 %v704, %v705
        %v707 = vrot.slane %v706, 4
        %v708 = vadd.f32 %v706, %v707
        %v709 = vrot.slane %v708, 2
        %v710 = vadd.f32 %v708, %v709
        %v711 = vrot.slane %v710, 1
        %v712 = vadd.f32 %v710, %v711
        %vm713 = vcmask 516096
        %714 = vst.msk [vmem:[%s296] sm:$0x1] %vm713, %v712
        %v715 = vmul.f32 %v684, %v684
        %v716 = vmul.f32 %v689, %v689
        %v717 = vmul.f32 %v694, %v694
        %v718 = vsel %vm697, %v715, 0.0
        %v719 = vsel %vm697, %v716, 0.0
        %v720 = vadd.f32 %v718, %v719
        %v721 = vsel %vm700, %v717, 0.0
        %v722 = vadd.f32 %v720, %v721
        %v723 = vrot.slane %v722, 4
        %v724 = vadd.f32 %v722, %v723
        %v725 = vrot.slane %v724, 2
        %v726 = vadd.f32 %v724, %v725
        %v727 = vrot.slane %v726, 1
        %v728 = vadd.f32 %v726, %v727
        %729 = vst.msk [vmem:[%s302] sm:$0x1] %vm713, %v728
        %p730 = scmp.lt.s32.totalorder %s26, 1
        %s731 = scalar_select %p730, %s26, 1
        %s732 = smul.addr %s731, 3
        %s733 = smul.addr %s732, 8
        %s734 = scalar_lea.vmem %s5, %s733
        %s735 = sand.u32 %s170, 1
        %s736 = scalar_lea.sflag [#allocation4], %s735
        %s737 = sand.u32 %s170, 1
        %s738 = scalar_lea.vmem [#allocation5], %s737
        %s739 = sand.u32 %s196, 1
        %s740 = scalar_lea.sflag [#allocation7], %s739
        %s741 = sand.u32 %s196, 1
        %s742 = scalar_lea.vmem [#allocation6], %s741
        // Predicated region
        $region45: #{tpu_custom_call.1} parent=39 // pred_check
          %p743 = pneg %p154
        $region46: #{tpu_custom_call.1} parent=39 // pred_check_branch
          %745 = sbr.rel (%p743) target = $region48
        $region47: #{tpu_custom_call.1} parent=39 // pred_region
          _
        $region48: #{tpu_custom_call.1} parent=39 // pred_fallthru
          _
        // Predicated region
        $region49: #{tpu_custom_call.1} parent=39 // pred_check
          %p746 = pneg %p180
        $region50: #{tpu_custom_call.1} parent=39 // pred_check_branch
          %748 = sbr.rel (%p746) target = $region52
        $region51: #{tpu_custom_call.1} parent=39 // pred_region
          %s750 = ssub.s32 16, 16
          %751 = vsyncadd %s736, %s750
          %s752 = smul.addr %s26, 16
          %s753 = scalar_lea.hbm %s6, %s752
          %s755 = sshll.u32 %s738, 4
          %s756 = int_to_ptr.vmem [resolvable:$true] %s755
          %758 = dma.vmem_to_hbm [thread:$0]  %s756, 16, %s753, %s736
        $region52: #{tpu_custom_call.1} parent=39 // pred_fallthru
          _
        // Predicated region
        $region53: #{tpu_custom_call.1} parent=39 // pred_check
          %p759 = pneg %p206
        $region54: #{tpu_custom_call.1} parent=39 // pred_check_branch
          %761 = sbr.rel (%p759) target = $region56
        $region55: #{tpu_custom_call.1} parent=39 // pred_region
          %s763 = ssub.s32 16, 16
          %764 = vsyncadd %s740, %s763
          %s765 = smul.addr %s26, 16
          %s766 = scalar_lea.hbm %s7, %s765
          %s768 = sshll.u32 %s742, 4
          %s769 = int_to_ptr.vmem [resolvable:$true] %s768
          %771 = dma.vmem_to_hbm [thread:$0]  %s769, 16, %s766, %s740
        $region56: #{tpu_custom_call.1} parent=39 // pred_fallthru
          _
      $region40: #{tpu_custom_call.1} parent=5 // pred_fallthru
        _
      %p772 = scmp.le.s32.totalorder 2, %s21
      // Predicated region
      $region57: #{tpu_custom_call.1} parent=5 // pred_check
        %p773 = pneg %p772
      $region58: #{tpu_custom_call.1} parent=5 // pred_check_branch
        %775 = sbr.rel (%p773) target = $region60
      $region59: #{tpu_custom_call.1} parent=5 // pred_region
        %s776 = ssub.s32 %s21, 2
        // Predicated region
        $region61: #{tpu_custom_call.1} parent=59 // pred_check
          %p777 = pneg %p160
        $region62: #{tpu_custom_call.1} parent=59 // pred_check_branch
          %779 = sbr.rel (%p777) target = $region64
        $region63: #{tpu_custom_call.1} parent=59 // pred_region
          %p780 = scmp.lt.s32.totalorder %s27, 1
          %s781 = scalar_select %p780, %s27, 1
          %s782 = smul.addr %s781, 3
          %s783 = smul.addr %s782, 8
          %s784 = scalar_lea.vmem %s5, %s783
        $region64: #{tpu_custom_call.1} parent=59 // pred_fallthru
          _
        // Predicated region
        $region65: #{tpu_custom_call.1} parent=59 // pred_check
          %p785 = pneg %p186
        $region66: #{tpu_custom_call.1} parent=59 // pred_check_branch
          %787 = sbr.rel (%p785) target = $region68
        $region67: #{tpu_custom_call.1} parent=59 // pred_region
          %s788 = sand.u32 %s171, 1
          %s789 = scalar_lea.sflag [#allocation4], %s788
          %s790 = sand.u32 %s171, 1
          %s791 = scalar_lea.vmem [#allocation5], %s790
          %792 = dma.done %s789, 16
        $region68: #{tpu_custom_call.1} parent=59 // pred_fallthru
          _
        // Predicated region
        $region69: #{tpu_custom_call.1} parent=59 // pred_check
          %p793 = pneg %p212
        $region70: #{tpu_custom_call.1} parent=59 // pred_check_branch
          %795 = sbr.rel (%p793) target = $region72
        $region71: #{tpu_custom_call.1} parent=59 // pred_region
          %s796 = sand.u32 %s197, 1
          %s797 = scalar_lea.sflag [#allocation7], %s796
          %s798 = sand.u32 %s197, 1
          %s799 = scalar_lea.vmem [#allocation6], %s798
          %800 = dma.done %s797, 16
        $region72: #{tpu_custom_call.1} parent=59 // pred_fallthru
          _
      $region60: #{tpu_custom_call.1} parent=5 // pred_fallthru
        _
    $region6: #{tpu_custom_call.1} parent=1 // loop_footer
      %s25 = sadd.s32 1, %s21
    $region7: #{tpu_custom_call.1} parent=1 // loop_footer_branch
      %20 = sbr.rel target = $region3
    $region8: #{tpu_custom_call.1} parent=1 // loop_exit
      _
    %801 = vsyncpa [#allocation3], 1
    %s802 = scalar_lea.sflag [#allocation3], 1
    %803 = vsyncpa %s802, 1
    %804 = vsyncpa [#allocation4], 1
    %s805 = scalar_lea.sflag [#allocation4], 1
    %806 = vsyncpa %s805, 1
    %807 = vsyncpa [#allocation7], 1
    %s808 = scalar_lea.sflag [#allocation7], 1
    %809 = vsyncpa %s808, 1

</llo_original>
